<compile_context>
chip_gen: v5e
topology: v5e:2x2
jax: 0.10.0
libtpu: 0.0.40
codegen_flags: <defaults>
</compile_context>

<pallas_src>
import jax
import jax.numpy as jnp
import numpy as np
from jax import lax
from jax.experimental import pallas as pl
from jax.experimental.pallas import tpu as pltpu

EPS = 1e-6


def _plan_tiling(n, H):
    """Pick (R_pad, rows_blk): residue rows of 128 lanes, and rows per grid step."""
    R0 = -(-n // 128)                      # ceil(n / 128)
    if R0 < 16:
        return R0, R0                      # single block (block dim == full dim is legal)
    # One block set = x (H f32/res) + planar affine (12 f32/res) + planar out (12 f32/res).
    # 16 MiB budget => double-buffered set stays well under v7x's 64 MiB VMEM per TC.
    budget = 16 * 1024 * 1024
    per_row = 128 * 4 * (H + 24)
    max_rows = max(8, min(256, (budget // per_row) // 8 * 8))
    steps = max(2, -(-R0 // max_rows))
    if steps % 2:                          # even step count: balanced v7x megacore split
        steps += 1
    rows_per_step = -(-R0 // steps)
    rows_blk = -(-rows_per_step // 8) * 8
    return steps * rows_blk, rows_blk


def _make_kernel(H, rows_blk):
    n_full = rows_blk // 8                 # full 8-row (1024-residue) groups per grid step
    rem = rows_blk % 8                     # partial trailing group (small inputs only)

    def kernel(params_ref, x_ref, w_ref, aff_ref, out_ref):
        # params_ref: SMEM (8,)  = [scale, bias0..bias5, 0], scale = sqrt(f1^2 + eps)
        # x_ref     : VMEM (rows_blk*128, H)   residue-major (no wrapper transpose)
        # w_ref     : VMEM (8, H)              rows 0..5 = backbone_fc.weight, 6..7 zero
        # aff_ref   : VMEM (12, rows_blk, 128) planar affine, row a*4+b = affine[..., a, b]
        # out_ref   : VMEM (12, rows_blk, 128) planar new affine
        w = w_ref[...]
        scale = params_ref[0]
        rr = scale * scale
        # Hoisted broadcasts (JAX does not CSE broadcast_in_dim inside the loop).
        scale_p = jnp.full((8, 128), scale, jnp.float32)
        bias_p = [jnp.full((8, 128), params_ref[1 + c], jnp.float32) for c in range(6)]

        def emit_group(base_res, base_row, gsz):
            width = gsz * 128
            # Linear(hfz -> 6) on the MXU, NT form (x stays residue-major): y = [8, width]
            x_g = x_ref[pl.ds(base_res, width), :]
            y = lax.dot_general(w, x_g, (((1,), (1,)), ((), ())),
                                preferred_element_type=jnp.float32)

            def comp(c):
                # lane->sublane planarize component c into a [gsz, 128] tile
                pieces = [y[c:c + 1, s * 128:(s + 1) * 128] for s in range(gsz)]
                t = pieces[0] if gsz == 1 else jnp.concatenate(pieces, axis=0)
                return t + bias_p[c][:gsz]

            qi, qj, qk = comp(0), comp(1), comp(2)
            tx, ty, tz = comp(3), comp(4), comp(5)
            sc = scale_p[:gsz]

            # quaternion_to_matrix with q = [scale, qi, qj, qk]; divide on the EUP
            two_s = 2.0 * pl.reciprocal(rr + qi * qi + qj * qj + qk * qk, approx=False)
            R2 = (
                (1.0 - two_s * (qj * qj + qk * qk),
                 two_s * (qi * qj - qk * sc),
                 two_s * (qi * qk + qj * sc)),
                (two_s * (qi * qj + qk * sc),
                 1.0 - two_s * (qi * qi + qk * qk),
                 two_s * (qj * qk - qi * sc)),
                (two_s * (qi * qk - qj * sc),
                 two_s * (qj * qk + qi * sc),
                 1.0 - two_s * (qi * qi + qj * qj)),
            )
            t2 = (tx, ty, tz)

            # affine_composition(affine, get_affine(R2, t2)):
            #   newR = R1 @ R2 ; newt = R1 @ t2 + t1   -- direct lane-dense row stores
            Ab = aff_ref[:, pl.ds(base_row, gsz), :]          # [12, gsz, 128]
            for a in range(3):
                A0, A1, A2, A3 = Ab[4 * a], Ab[4 * a + 1], Ab[4 * a + 2], Ab[4 * a + 3]
                for b in range(3):
                    out_ref[4 * a + b, pl.ds(base_row, gsz), :] = (
                        A0 * R2[0][b] + A1 * R2[1][b] + A2 * R2[2][b])
                out_ref[4 * a + 3, pl.ds(base_row, gsz), :] = (
                    A0 * t2[0] + A1 * t2[1] + A2 * t2[2] + A3)

        if n_full > 0:
            def body(g, carry):
                emit_group(pl.multiple_of(g * 1024, 1024),
                           pl.multiple_of(g * 8, 8), 8)
                return carry
            lax.fori_loop(0, n_full, body, 0, unroll=min(2, n_full))
        if rem > 0:
            emit_group(n_full * 1024, n_full * 8, rem)

    return kernel


def _backbone_frame_call(x_rm, affT, w_pad, params, rows_blk):
    """Planar fast path.  x_rm: [n_pad, H] residue-major; affT: [12, R_pad, 128] planar.
    Returns the new affine in the same planar layout."""
    n_pad, H = x_rm.shape
    R_pad = n_pad // 128
    tile_res = rows_blk * 128
    grid = (R_pad // rows_blk,)
    return pl.pallas_call(
        _make_kernel(H, rows_blk),
        out_shape=jax.ShapeDtypeStruct((12, R_pad, 128), jnp.float32),
        grid=grid,
        in_specs=[
            pl.BlockSpec(memory_space=pltpu.MemorySpace.SMEM),       # params (scale + bias)
            pl.BlockSpec((tile_res, H), lambda i: (i, 0)),           # x, residue-major
            pl.BlockSpec((8, H), lambda i: (0, 0)),                  # padded weight
            pl.BlockSpec((12, rows_blk, 128), lambda i: (0, i, 0)),  # planar affine
        ],
        out_specs=pl.BlockSpec((12, rows_blk, 128), lambda i: (0, i, 0)),
        compiler_params=pltpu.CompilerParams(
            dimension_semantics=("parallel",),
            vmem_limit_bytes=48 * 1024 * 1024,
        ),
    )(params, x_rm, w_pad, affT)


def backbone_frame_net(x, affine, weight, bias, f1):
    """Standard interface: x [..., H], affine [..., 3, 4] -> new affine [..., 3, 4]."""
    lead = x.shape[:-1]
    H = x.shape[-1]
    n = int(np.prod(lead)) if lead else 1

    R_pad, rows_blk = _plan_tiling(n, H)
    n_pad = R_pad * 128

    # x: residue-major, pad only (no transpose).
    xf = x.reshape(n, H).astype(jnp.float32)
    if n != n_pad:
        xf = jnp.pad(xf, ((0, n_pad - n), (0, 0)))

    # affine: component-major planar (only remaining wrapper relayout; disappears when
    # callers keep the planar layout across iterations via _backbone_frame_call).
    af = affine.reshape(n, 12).astype(jnp.float32)
    if n == n_pad:
        affT = af.T.reshape(12, R_pad, 128)
    else:
        affT = jnp.zeros((12, n_pad), jnp.float32).at[:, :n].set(af.T).reshape(12, R_pad, 128)

    w_pad = jnp.zeros((8, H), jnp.float32).at[:6, :].set(weight.astype(jnp.float32))
    scale = jnp.sqrt(jnp.square(jnp.asarray(f1, jnp.float32)) + EPS)    # hoisted sqrt
    params = (jnp.zeros((8,), jnp.float32)
              .at[0].set(scale)
              .at[1:7].set(bias.astype(jnp.float32)))

    outT = _backbone_frame_call(xf, affT, w_pad, params, rows_blk)
    return outT.reshape(12, n_pad)[:, :n].T.reshape(lead + (3, 4))


def backbone_frame_reference(x, affine, weight, bias, f1):
    """Pure-JAX reference mirroring the PyTorch forward."""
    y = x @ weight.T + bias
    scale = jnp.sqrt(f1 * f1 + EPS)
    ones = jnp.full(y.shape[:-1] + (1,), scale, jnp.float32)
    y7 = jnp.concatenate([ones, y], axis=-1)
    q = y7[..., :4]
    t = y7[..., 4:]
    r_, i_, j_, k_ = q[..., 0], q[..., 1], q[..., 2], q[..., 3]
    two_s = 2.0 / (q * q).sum(-1)
    R = jnp.stack(
        [
            1 - two_s * (j_ * j_ + k_ * k_), two_s * (i_ * j_ - k_ * r_), two_s * (i_ * k_ + j_ * r_),
            two_s * (i_ * j_ + k_ * r_), 1 - two_s * (i_ * i_ + k_ * k_), two_s * (j_ * k_ - i_ * r_),
            two_s * (i_ * k_ - j_ * r_), two_s * (j_ * k_ + i_ * r_), 1 - two_s * (i_ * i_ + j_ * j_),
        ],
        axis=-1,
    ).reshape(q.shape[:-1] + (3, 3))
    R1 = affine[..., :3, :3]
    t1 = affine[..., :3, 3]
    newR = jnp.einsum("...ij,...jk->...ik", R1, R)
    newt = jnp.einsum("...ij,...j->...i", R1, t) + t1
    return jnp.concatenate([newR, newt[..., None]], axis=-1)


if __name__ == "__main__":
    key = jax.random.PRNGKey(0)
    kx, ka, kw, kx2, ka2 = jax.random.split(key, 5)

    H = 32  # hfz
    # Deterministic parameter init mirroring the module's __init__:
    #   weight ~ N(0, 0.02), bias = 0, f1 = 1.5
    weight = 0.02 * jax.random.normal(kw, (6, H), dtype=jnp.float32)
    bias = jnp.zeros((6,), jnp.float32)
    f1 = jnp.float32(1.5)

    # Small shape (single block, partial trailing group, residue padding).
    B, N = 2, 60
    x = jax.random.normal(kx, (B, N, H), dtype=jnp.float32)
    affine = jax.random.normal(ka, (B, N, 3, 4), dtype=jnp.float32)
    out = jax.block_until_ready(backbone_frame_net(x, affine, weight, bias, f1))
    ref = backbone_frame_reference(x, affine, weight, bias, f1)
    assert out.shape == (B, N, 3, 4)
    np.testing.assert_allclose(np.asarray(out), np.asarray(ref), rtol=1e-4, atol=1e-4)

    # Larger shape: multiple (even) grid steps, fori_loop over groups inside each step.
    B2, N2 = 2, 2048
    x2 = jax.random.normal(kx2, (B2, N2, H), dtype=jnp.float32)
    affine2 = jax.random.normal(ka2, (B2, N2, 3, 4), dtype=jnp.float32)
    out2 = jax.block_until_ready(backbone_frame_net(x2, affine2, weight, bias, f1))
    ref2 = backbone_frame_reference(x2, affine2, weight, bias, f1)
    np.testing.assert_allclose(np.asarray(out2), np.asarray(ref2), rtol=1e-4, atol=1e-4)

    print("KERNEL_OK")
</pallas_src>

<mosaic_0001>
module attributes {stable_mosaic.version = 11 : i64} {
  func.func @kernel(%arg0: i32, %arg1: memref<8xf32, #tpu.memory_space<smem>>, %arg2: memref<128x32xf32, #tpu.memory_space<vmem>>, %arg3: memref<8x32xf32, #tpu.memory_space<vmem>>, %arg4: memref<12x1x128xf32, #tpu.memory_space<vmem>>, %arg5: memref<12x1x128xf32, #tpu.memory_space<vmem>>) attributes {dimension_semantics = [#tpu.dimension_semantics<parallel>], iteration_bounds = array<i64: 1>, scalar_prefetch = 0 : i64, scratch_operands = 0 : i64, tpu.core_type = #tpu.core_type<tc>, window_params = [{transform_indices = @transform_0, window_bounds = array<i64: 8>}, {transform_indices = @transform_1, window_bounds = array<i64: 128, 32>}, {pipeline_mode = #tpu.pipeline_mode<synchronous>, transform_indices = @transform_2, window_bounds = array<i64: 8, 32>}, {transform_indices = @transform_3, window_bounds = array<i64: 12, 1, 128>}, {transform_indices = @transform_4, window_bounds = array<i64: 12, 1, 128>}]} {
    %c0 = arith.constant 0 : index
    %c0_0 = arith.constant 0 : index
    %0 = vector.load %arg3[%c0, %c0_0] : memref<8x32xf32, #tpu.memory_space<vmem>>, vector<8x32xf32>
    %c0_1 = arith.constant 0 : index
    %1 = memref.load %arg1[%c0_1] : memref<8xf32, #tpu.memory_space<smem>>
    %2 = arith.mulf %1, %1 : f32
    %3 = vector.broadcast %1 : f32 to vector<8x128xf32>
    %c1 = arith.constant 1 : index
    %4 = memref.load %arg1[%c1] : memref<8xf32, #tpu.memory_space<smem>>
    %5 = vector.broadcast %4 : f32 to vector<8x128xf32>
    %c2 = arith.constant 2 : index
    %6 = memref.load %arg1[%c2] : memref<8xf32, #tpu.memory_space<smem>>
    %7 = vector.broadcast %6 : f32 to vector<8x128xf32>
    %c3 = arith.constant 3 : index
    %8 = memref.load %arg1[%c3] : memref<8xf32, #tpu.memory_space<smem>>
    %9 = vector.broadcast %8 : f32 to vector<8x128xf32>
    %c4 = arith.constant 4 : index
    %10 = memref.load %arg1[%c4] : memref<8xf32, #tpu.memory_space<smem>>
    %11 = vector.broadcast %10 : f32 to vector<8x128xf32>
    %c5 = arith.constant 5 : index
    %12 = memref.load %arg1[%c5] : memref<8xf32, #tpu.memory_space<smem>>
    %13 = vector.broadcast %12 : f32 to vector<8x128xf32>
    %c6 = arith.constant 6 : index
    %14 = memref.load %arg1[%c6] : memref<8xf32, #tpu.memory_space<smem>>
    %15 = vector.broadcast %14 : f32 to vector<8x128xf32>
    %c0_2 = arith.constant 0 : index
    %c0_3 = arith.constant 0 : index
    %16 = vector.load %arg2[%c0_2, %c0_3] : memref<128x32xf32, #tpu.memory_space<vmem>>, vector<128x32xf32>
    %cst = arith.constant dense<0.000000e+00> : vector<8x128xf32>
    %17 = tpu.matmul %0, %16, %cst {dimension_numbers = #tpu.dot_dimension_numbers<[1], [1], [0], [0], [0, 0, 1, 0], [], []>} : vector<8x32xf32>, vector<128x32xf32>, vector<8x128xf32> -> vector<8x128xf32>
    %18 = vector.extract_strided_slice %17 {offsets = [0, 0], sizes = [1, 128], strides = [1, 1]} : vector<8x128xf32> to vector<1x128xf32>
    %19 = vector.extract_strided_slice %5 {offsets = [0, 0], sizes = [1, 128], strides = [1, 1]} : vector<8x128xf32> to vector<1x128xf32>
    %20 = arith.addf %18, %19 : vector<1x128xf32>
    %21 = vector.extract_strided_slice %17 {offsets = [1, 0], sizes = [1, 128], strides = [1, 1]} : vector<8x128xf32> to vector<1x128xf32>
    %22 = vector.extract_strided_slice %7 {offsets = [0, 0], sizes = [1, 128], strides = [1, 1]} : vector<8x128xf32> to vector<1x128xf32>
    %23 = arith.addf %21, %22 : vector<1x128xf32>
    %24 = vector.extract_strided_slice %17 {offsets = [2, 0], sizes = [1, 128], strides = [1, 1]} : vector<8x128xf32> to vector<1x128xf32>
    %25 = vector.extract_strided_slice %9 {offsets = [0, 0], sizes = [1, 128], strides = [1, 1]} : vector<8x128xf32> to vector<1x128xf32>
    %26 = arith.addf %24, %25 : vector<1x128xf32>
    %27 = vector.extract_strided_slice %17 {offsets = [3, 0], sizes = [1, 128], strides = [1, 1]} : vector<8x128xf32> to vector<1x128xf32>
    %28 = vector.extract_strided_slice %11 {offsets = [0, 0], sizes = [1, 128], strides = [1, 1]} : vector<8x128xf32> to vector<1x128xf32>
    %29 = arith.addf %27, %28 : vector<1x128xf32>
    %30 = vector.extract_strided_slice %17 {offsets = [4, 0], sizes = [1, 128], strides = [1, 1]} : vector<8x128xf32> to vector<1x128xf32>
    %31 = vector.extract_strided_slice %13 {offsets = [0, 0], sizes = [1, 128], strides = [1, 1]} : vector<8x128xf32> to vector<1x128xf32>
    %32 = arith.addf %30, %31 : vector<1x128xf32>
    %33 = vector.extract_strided_slice %17 {offsets = [5, 0], sizes = [1, 128], strides = [1, 1]} : vector<8x128xf32> to vector<1x128xf32>
    %34 = vector.extract_strided_slice %15 {offsets = [0, 0], sizes = [1, 128], strides = [1, 1]} : vector<8x128xf32> to vector<1x128xf32>
    %35 = arith.addf %33, %34 : vector<1x128xf32>
    %36 = vector.extract_strided_slice %3 {offsets = [0, 0], sizes = [1, 128], strides = [1, 1]} : vector<8x128xf32> to vector<1x128xf32>
    %37 = arith.mulf %20, %20 : vector<1x128xf32>
    %38 = vector.broadcast %2 : f32 to vector<1x128xf32>
    %39 = arith.addf %38, %37 : vector<1x128xf32>
    %40 = arith.mulf %23, %23 : vector<1x128xf32>
    %41 = arith.addf %39, %40 : vector<1x128xf32>
    %42 = arith.mulf %26, %26 : vector<1x128xf32>
    %43 = arith.addf %41, %42 : vector<1x128xf32>
    %44 = tpu.reciprocal %43 : vector<1x128xf32> -> vector<1x128xf32>
    %cst_4 = arith.constant 2.000000e+00 : f32
    %45 = vector.broadcast %cst_4 : f32 to vector<1x128xf32>
    %46 = arith.mulf %45, %44 : vector<1x128xf32>
    %47 = arith.mulf %23, %23 : vector<1x128xf32>
    %48 = arith.mulf %26, %26 : vector<1x128xf32>
    %49 = arith.addf %47, %48 : vector<1x128xf32>
    %50 = arith.mulf %46, %49 : vector<1x128xf32>
    %cst_5 = arith.constant 1.000000e+00 : f32
    %51 = vector.broadcast %cst_5 : f32 to vector<1x128xf32>
    %52 = arith.subf %51, %50 : vector<1x128xf32>
    %53 = arith.mulf %20, %23 : vector<1x128xf32>
    %54 = arith.mulf %26, %36 : vector<1x128xf32>
    %55 = arith.subf %53, %54 : vector<1x128xf32>
    %56 = arith.mulf %46, %55 : vector<1x128xf32>
    %57 = arith.mulf %20, %26 : vector<1x128xf32>
    %58 = arith.mulf %23, %36 : vector<1x128xf32>
    %59 = arith.addf %57, %58 : vector<1x128xf32>
    %60 = arith.mulf %46, %59 : vector<1x128xf32>
    %61 = arith.mulf %20, %23 : vector<1x128xf32>
    %62 = arith.mulf %26, %36 : vector<1x128xf32>
    %63 = arith.addf %61, %62 : vector<1x128xf32>
    %64 = arith.mulf %46, %63 : vector<1x128xf32>
    %65 = arith.mulf %20, %20 : vector<1x128xf32>
    %66 = arith.mulf %26, %26 : vector<1x128xf32>
    %67 = arith.addf %65, %66 : vector<1x128xf32>
    %68 = arith.mulf %46, %67 : vector<1x128xf32>
    %cst_6 = arith.constant 1.000000e+00 : f32
    %69 = vector.broadcast %cst_6 : f32 to vector<1x128xf32>
    %70 = arith.subf %69, %68 : vector<1x128xf32>
    %71 = arith.mulf %23, %26 : vector<1x128xf32>
    %72 = arith.mulf %20, %36 : vector<1x128xf32>
    %73 = arith.subf %71, %72 : vector<1x128xf32>
    %74 = arith.mulf %46, %73 : vector<1x128xf32>
    %75 = arith.mulf %20, %26 : vector<1x128xf32>
    %76 = arith.mulf %23, %36 : vector<1x128xf32>
    %77 = arith.subf %75, %76 : vector<1x128xf32>
    %78 = arith.mulf %46, %77 : vector<1x128xf32>
    %79 = arith.mulf %23, %26 : vector<1x128xf32>
    %80 = arith.mulf %20, %36 : vector<1x128xf32>
    %81 = arith.addf %79, %80 : vector<1x128xf32>
    %82 = arith.mulf %46, %81 : vector<1x128xf32>
    %83 = arith.mulf %20, %20 : vector<1x128xf32>
    %84 = arith.mulf %23, %23 : vector<1x128xf32>
    %85 = arith.addf %83, %84 : vector<1x128xf32>
    %86 = arith.mulf %46, %85 : vector<1x128xf32>
    %cst_7 = arith.constant 1.000000e+00 : f32
    %87 = vector.broadcast %cst_7 : f32 to vector<1x128xf32>
    %88 = arith.subf %87, %86 : vector<1x128xf32>
    %c0_8 = arith.constant 0 : index
    %c0_9 = arith.constant 0 : index
    %c0_10 = arith.constant 0 : index
    %89 = vector.load %arg4[%c0_8, %c0_9, %c0_10] : memref<12x1x128xf32, #tpu.memory_space<vmem>>, vector<12x1x128xf32>
    %90 = vector.extract_strided_slice %89 {offsets = [0, 0, 0], sizes = [1, 1, 128], strides = [1, 1, 1]} : vector<12x1x128xf32> to vector<1x1x128xf32>
    %91 = vector.shape_cast %90 : vector<1x1x128xf32> to vector<1x128xf32>
    %92 = vector.extract_strided_slice %89 {offsets = [1, 0, 0], sizes = [1, 1, 128], strides = [1, 1, 1]} : vector<12x1x128xf32> to vector<1x1x128xf32>
    %93 = vector.shape_cast %92 : vector<1x1x128xf32> to vector<1x128xf32>
    %94 = vector.extract_strided_slice %89 {offsets = [2, 0, 0], sizes = [1, 1, 128], strides = [1, 1, 1]} : vector<12x1x128xf32> to vector<1x1x128xf32>
    %95 = vector.shape_cast %94 : vector<1x1x128xf32> to vector<1x128xf32>
    %96 = vector.extract_strided_slice %89 {offsets = [3, 0, 0], sizes = [1, 1, 128], strides = [1, 1, 1]} : vector<12x1x128xf32> to vector<1x1x128xf32>
    %97 = vector.shape_cast %96 : vector<1x1x128xf32> to vector<1x128xf32>
    %98 = arith.mulf %91, %52 : vector<1x128xf32>
    %99 = arith.mulf %93, %64 : vector<1x128xf32>
    %100 = arith.addf %98, %99 : vector<1x128xf32>
    %101 = arith.mulf %95, %78 : vector<1x128xf32>
    %102 = arith.addf %100, %101 : vector<1x128xf32>
    %c0_11 = arith.constant 0 : index
    %c0_12 = arith.constant 0 : index
    %c0_13 = arith.constant 0 : index
    %103 = vector.load %arg5[%c0_11, %c0_12, %c0_13] : memref<12x1x128xf32, #tpu.memory_space<vmem>>, vector<1x1x128xf32>
    %104 = vector.shape_cast %103 : vector<1x1x128xf32> to vector<1x128xf32>
    %105 = vector.shape_cast %102 : vector<1x128xf32> to vector<1x1x128xf32>
    tpu.vector_store %arg5[%c0_11, %c0_12, %c0_13], %105 {strides = array<i32>} : memref<12x1x128xf32, #tpu.memory_space<vmem>>, vector<1x1x128xf32>,
    %106 = arith.mulf %91, %56 : vector<1x128xf32>
    %107 = arith.mulf %93, %70 : vector<1x128xf32>
    %108 = arith.addf %106, %107 : vector<1x128xf32>
    %109 = arith.mulf %95, %82 : vector<1x128xf32>
    %110 = arith.addf %108, %109 : vector<1x128xf32>
    %c1_14 = arith.constant 1 : index
    %c0_15 = arith.constant 0 : index
    %c0_16 = arith.constant 0 : index
    %111 = vector.load %arg5[%c1_14, %c0_15, %c0_16] : memref<12x1x128xf32, #tpu.memory_space<vmem>>, vector<1x1x128xf32>
    %112 = vector.shape_cast %111 : vector<1x1x128xf32> to vector<1x128xf32>
    %113 = vector.shape_cast %110 : vector<1x128xf32> to vector<1x1x128xf32>
    tpu.vector_store %arg5[%c1_14, %c0_15, %c0_16], %113 {strides = array<i32>} : memref<12x1x128xf32, #tpu.memory_space<vmem>>, vector<1x1x128xf32>,
    %114 = arith.mulf %91, %60 : vector<1x128xf32>
    %115 = arith.mulf %93, %74 : vector<1x128xf32>
    %116 = arith.addf %114, %115 : vector<1x128xf32>
    %117 = arith.mulf %95, %88 : vector<1x128xf32>
    %118 = arith.addf %116, %117 : vector<1x128xf32>
    %c2_17 = arith.constant 2 : index
    %c0_18 = arith.constant 0 : index
    %c0_19 = arith.constant 0 : index
    %119 = vector.load %arg5[%c2_17, %c0_18, %c0_19] : memref<12x1x128xf32, #tpu.memory_space<vmem>>, vector<1x1x128xf32>
    %120 = vector.shape_cast %119 : vector<1x1x128xf32> to vector<1x128xf32>
    %121 = vector.shape_cast %118 : vector<1x128xf32> to vector<1x1x128xf32>
    tpu.vector_store %arg5[%c2_17, %c0_18, %c0_19], %121 {strides = array<i32>} : memref<12x1x128xf32, #tpu.memory_space<vmem>>, vector<1x1x128xf32>,
    %122 = arith.mulf %91, %29 : vector<1x128xf32>
    %123 = arith.mulf %93, %32 : vector<1x128xf32>
    %124 = arith.addf %122, %123 : vector<1x128xf32>
    %125 = arith.mulf %95, %35 : vector<1x128xf32>
    %126 = arith.addf %124, %125 : vector<1x128xf32>
    %127 = arith.addf %126, %97 : vector<1x128xf32>
    %c3_20 = arith.constant 3 : index
    %c0_21 = arith.constant 0 : index
    %c0_22 = arith.constant 0 : index
    %128 = vector.load %arg5[%c3_20, %c0_21, %c0_22] : memref<12x1x128xf32, #tpu.memory_space<vmem>>, vector<1x1x128xf32>
    %129 = vector.shape_cast %128 : vector<1x1x128xf32> to vector<1x128xf32>
    %130 = vector.shape_cast %127 : vector<1x128xf32> to vector<1x1x128xf32>
    tpu.vector_store %arg5[%c3_20, %c0_21, %c0_22], %130 {strides = array<i32>} : memref<12x1x128xf32, #tpu.memory_space<vmem>>, vector<1x1x128xf32>,
    %131 = vector.extract_strided_slice %89 {offsets = [4, 0, 0], sizes = [1, 1, 128], strides = [1, 1, 1]} : vector<12x1x128xf32> to vector<1x1x128xf32>
    %132 = vector.shape_cast %131 : vector<1x1x128xf32> to vector<1x128xf32>
    %133 = vector.extract_strided_slice %89 {offsets = [5, 0, 0], sizes = [1, 1, 128], strides = [1, 1, 1]} : vector<12x1x128xf32> to vector<1x1x128xf32>
    %134 = vector.shape_cast %133 : vector<1x1x128xf32> to vector<1x128xf32>
    %135 = vector.extract_strided_slice %89 {offsets = [6, 0, 0], sizes = [1, 1, 128], strides = [1, 1, 1]} : vector<12x1x128xf32> to vector<1x1x128xf32>
    %136 = vector.shape_cast %135 : vector<1x1x128xf32> to vector<1x128xf32>
    %137 = vector.extract_strided_slice %89 {offsets = [7, 0, 0], sizes = [1, 1, 128], strides = [1, 1, 1]} : vector<12x1x128xf32> to vector<1x1x128xf32>
    %138 = vector.shape_cast %137 : vector<1x1x128xf32> to vector<1x128xf32>
    %139 = arith.mulf %132, %52 : vector<1x128xf32>
    %140 = arith.mulf %134, %64 : vector<1x128xf32>
    %141 = arith.addf %139, %140 : vector<1x128xf32>
    %142 = arith.mulf %136, %78 : vector<1x128xf32>
    %143 = arith.addf %141, %142 : vector<1x128xf32>
    %c4_23 = arith.constant 4 : index
    %c0_24 = arith.constant 0 : index
    %c0_25 = arith.constant 0 : index
    %144 = vector.load %arg5[%c4_23, %c0_24, %c0_25] : memref<12x1x128xf32, #tpu.memory_space<vmem>>, vector<1x1x128xf32>
    %145 = vector.shape_cast %144 : vector<1x1x128xf32> to vector<1x128xf32>
    %146 = vector.shape_cast %143 : vector<1x128xf32> to vector<1x1x128xf32>
    tpu.vector_store %arg5[%c4_23, %c0_24, %c0_25], %146 {strides = array<i32>} : memref<12x1x128xf32, #tpu.memory_space<vmem>>, vector<1x1x128xf32>,
    %147 = arith.mulf %132, %56 : vector<1x128xf32>
    %148 = arith.mulf %134, %70 : vector<1x128xf32>
    %149 = arith.addf %147, %148 : vector<1x128xf32>
    %150 = arith.mulf %136, %82 : vector<1x128xf32>
    %151 = arith.addf %149, %150 : vector<1x128xf32>
    %c5_26 = arith.constant 5 : index
    %c0_27 = arith.constant 0 : index
    %c0_28 = arith.constant 0 : index
    %152 = vector.load %arg5[%c5_26, %c0_27, %c0_28] : memref<12x1x128xf32, #tpu.memory_space<vmem>>, vector<1x1x128xf32>
    %153 = vector.shape_cast %152 : vector<1x1x128xf32> to vector<1x128xf32>
    %154 = vector.shape_cast %151 : vector<1x128xf32> to vector<1x1x128xf32>
    tpu.vector_store %arg5[%c5_26, %c0_27, %c0_28], %154 {strides = array<i32>} : memref<12x1x128xf32, #tpu.memory_space<vmem>>, vector<1x1x128xf32>,
    %155 = arith.mulf %132, %60 : vector<1x128xf32>
    %156 = arith.mulf %134, %74 : vector<1x128xf32>
    %157 = arith.addf %155, %156 : vector<1x128xf32>
    %158 = arith.mulf %136, %88 : vector<1x128xf32>
    %159 = arith.addf %157, %158 : vector<1x128xf32>
    %c6_29 = arith.constant 6 : index
    %c0_30 = arith.constant 0 : index
    %c0_31 = arith.constant 0 : index
    %160 = vector.load %arg5[%c6_29, %c0_30, %c0_31] : memref<12x1x128xf32, #tpu.memory_space<vmem>>, vector<1x1x128xf32>
    %161 = vector.shape_cast %160 : vector<1x1x128xf32> to vector<1x128xf32>
    %162 = vector.shape_cast %159 : vector<1x128xf32> to vector<1x1x128xf32>
    tpu.vector_store %arg5[%c6_29, %c0_30, %c0_31], %162 {strides = array<i32>} : memref<12x1x128xf32, #tpu.memory_space<vmem>>, vector<1x1x128xf32>,
    %163 = arith.mulf %132, %29 : vector<1x128xf32>
    %164 = arith.mulf %134, %32 : vector<1x128xf32>
    %165 = arith.addf %163, %164 : vector<1x128xf32>
    %166 = arith.mulf %136, %35 : vector<1x128xf32>
    %167 = arith.addf %165, %166 : vector<1x128xf32>
    %168 = arith.addf %167, %138 : vector<1x128xf32>
    %c7 = arith.constant 7 : index
    %c0_32 = arith.constant 0 : index
    %c0_33 = arith.constant 0 : index
    %169 = vector.load %arg5[%c7, %c0_32, %c0_33] : memref<12x1x128xf32, #tpu.memory_space<vmem>>, vector<1x1x128xf32>
    %170 = vector.shape_cast %169 : vector<1x1x128xf32> to vector<1x128xf32>
    %171 = vector.shape_cast %168 : vector<1x128xf32> to vector<1x1x128xf32>
    tpu.vector_store %arg5[%c7, %c0_32, %c0_33], %171 {strides = array<i32>} : memref<12x1x128xf32, #tpu.memory_space<vmem>>, vector<1x1x128xf32>,
    %172 = vector.extract_strided_slice %89 {offsets = [8, 0, 0], sizes = [1, 1, 128], strides = [1, 1, 1]} : vector<12x1x128xf32> to vector<1x1x128xf32>
    %173 = vector.shape_cast %172 : vector<1x1x128xf32> to vector<1x128xf32>
    %174 = vector.extract_strided_slice %89 {offsets = [9, 0, 0], sizes = [1, 1, 128], strides = [1, 1, 1]} : vector<12x1x128xf32> to vector<1x1x128xf32>
    %175 = vector.shape_cast %174 : vector<1x1x128xf32> to vector<1x128xf32>
    %176 = vector.extract_strided_slice %89 {offsets = [10, 0, 0], sizes = [1, 1, 128], strides = [1, 1, 1]} : vector<12x1x128xf32> to vector<1x1x128xf32>
    %177 = vector.shape_cast %176 : vector<1x1x128xf32> to vector<1x128xf32>
    %178 = vector.extract_strided_slice %89 {offsets = [11, 0, 0], sizes = [1, 1, 128], strides = [1, 1, 1]} : vector<12x1x128xf32> to vector<1x1x128xf32>
    %179 = vector.shape_cast %178 : vector<1x1x128xf32> to vector<1x128xf32>
    %180 = arith.mulf %173, %52 : vector<1x128xf32>
    %181 = arith.mulf %175, %64 : vector<1x128xf32>
    %182 = arith.addf %180, %181 : vector<1x128xf32>
    %183 = arith.mulf %177, %78 : vector<1x128xf32>
    %184 = arith.addf %182, %183 : vector<1x128xf32>
    %c8 = arith.constant 8 : index
    %c0_34 = arith.constant 0 : index
    %c0_35 = arith.constant 0 : index
    %185 = vector.load %arg5[%c8, %c0_34, %c0_35] : memref<12x1x128xf32, #tpu.memory_space<vmem>>, vector<1x1x128xf32>
    %186 = vector.shape_cast %185 : vector<1x1x128xf32> to vector<1x128xf32>
    %187 = vector.shape_cast %184 : vector<1x128xf32> to vector<1x1x128xf32>
    tpu.vector_store %arg5[%c8, %c0_34, %c0_35], %187 {strides = array<i32>} : memref<12x1x128xf32, #tpu.memory_space<vmem>>, vector<1x1x128xf32>,
    %188 = arith.mulf %173, %56 : vector<1x128xf32>
    %189 = arith.mulf %175, %70 : vector<1x128xf32>
    %190 = arith.addf %188, %189 : vector<1x128xf32>
    %191 = arith.mulf %177, %82 : vector<1x128xf32>
    %192 = arith.addf %190, %191 : vector<1x128xf32>
    %c9 = arith.constant 9 : index
    %c0_36 = arith.constant 0 : index
    %c0_37 = arith.constant 0 : index
    %193 = vector.load %arg5[%c9, %c0_36, %c0_37] : memref<12x1x128xf32, #tpu.memory_space<vmem>>, vector<1x1x128xf32>
    %194 = vector.shape_cast %193 : vector<1x1x128xf32> to vector<1x128xf32>
    %195 = vector.shape_cast %192 : vector<1x128xf32> to vector<1x1x128xf32>
    tpu.vector_store %arg5[%c9, %c0_36, %c0_37], %195 {strides = array<i32>} : memref<12x1x128xf32, #tpu.memory_space<vmem>>, vector<1x1x128xf32>,
    %196 = arith.mulf %173, %60 : vector<1x128xf32>
    %197 = arith.mulf %175, %74 : vector<1x128xf32>
    %198 = arith.addf %196, %197 : vector<1x128xf32>
    %199 = arith.mulf %177, %88 : vector<1x128xf32>
    %200 = arith.addf %198, %199 : vector<1x128xf32>
    %c10 = arith.constant 10 : index
    %c0_38 = arith.constant 0 : index
    %c0_39 = arith.constant 0 : index
    %201 = vector.load %arg5[%c10, %c0_38, %c0_39] : memref<12x1x128xf32, #tpu.memory_space<vmem>>, vector<1x1x128xf32>
    %202 = vector.shape_cast %201 : vector<1x1x128xf32> to vector<1x128xf32>
    %203 = vector.shape_cast %200 : vector<1x128xf32> to vector<1x1x128xf32>
    tpu.vector_store %arg5[%c10, %c0_38, %c0_39], %203 {strides = array<i32>} : memref<12x1x128xf32, #tpu.memory_space<vmem>>, vector<1x1x128xf32>,
    %204 = arith.mulf %173, %29 : vector<1x128xf32>
    %205 = arith.mulf %175, %32 : vector<1x128xf32>
    %206 = arith.addf %204, %205 : vector<1x128xf32>
    %207 = arith.mulf %177, %35 : vector<1x128xf32>
    %208 = arith.addf %206, %207 : vector<1x128xf32>
    %209 = arith.addf %208, %179 : vector<1x128xf32>
    %c11 = arith.constant 11 : index
    %c0_40 = arith.constant 0 : index
    %c0_41 = arith.constant 0 : index
    %210 = vector.load %arg5[%c11, %c0_40, %c0_41] : memref<12x1x128xf32, #tpu.memory_space<vmem>>, vector<1x1x128xf32>
    %211 = vector.shape_cast %210 : vector<1x1x128xf32> to vector<1x128xf32>
    %212 = vector.shape_cast %209 : vector<1x128xf32> to vector<1x1x128xf32>
    tpu.vector_store %arg5[%c11, %c0_40, %c0_41], %212 {strides = array<i32>} : memref<12x1x128xf32, #tpu.memory_space<vmem>>, vector<1x1x128xf32>,
    return
  }
  func.func @transform_0(%arg0: i32) -> i32 {
    %c0_i32 = arith.constant 0 : i32
    %c0_i32_0 = arith.constant 0 : i32
    return %c0_i32 : i32
  }
  func.func @transform_1(%arg0: i32) -> (i32, i32) {
    %c0_i32 = arith.constant 0 : i32
    %c0_i32_0 = arith.constant 0 : i32
    return %arg0, %c0_i32 : i32, i32
  }
  func.func @transform_2(%arg0: i32) -> (i32, i32) {
    %c0_i32 = arith.constant 0 : i32
    %c0_i32_0 = arith.constant 0 : i32
    %c0_i32_1 = arith.constant 0 : i32
    return %c0_i32, %c0_i32_0 : i32, i32
  }
  func.func @transform_3(%arg0: i32) -> (i32, i32, i32) {
    %c0_i32 = arith.constant 0 : i32
    %c0_i32_0 = arith.constant 0 : i32
    %c0_i32_1 = arith.constant 0 : i32
    return %c0_i32, %arg0, %c0_i32_0 : i32, i32, i32
  }
  func.func @transform_4(%arg0: i32) -> (i32, i32, i32) {
    %c0_i32 = arith.constant 0 : i32
    %c0_i32_0 = arith.constant 0 : i32
    %c0_i32_1 = arith.constant 0 : i32
    return %c0_i32, %arg0, %c0_i32_0 : i32, i32, i32
  }
}

</mosaic_0001>

<llo_original>
// kernel: tpu_custom_call.1
$region0: #{tpu_custom_call.1}
  #allocation0 [shape = 'u32[]', space=smem, size = 0x4, offset = 0x4, fixed_abs, tag = 'smem constant byte address 0x4 - core index']
  #allocation1 [shape = 'u32[72,128]{1,0:T(1,128)}', space=vmem, size = 0x9000, scoped, tag = 'internal scratch']
  %s0 = inlined_call_operand.vmem [shape: f32[8], index: 0, kind: input, shape index: {}]
  %s1 = inlined_call_operand.vmem [shape: f32[128,32], index: 1, kind: input, shape index: {}]
  %s2 = inlined_call_operand.vmem [shape: f32[8,32], index: 2, kind: input, shape index: {}]
  %s3 = inlined_call_operand.vmem [shape: f32[12,1,128], index: 3, kind: input, shape index: {}]
  %s4 = inlined_call_operand.hbm [shape: f32[12,1,128], index: 4, kind: output, shape index: {}]
  %s5 = sld [smem:[#allocation0]]
  $region30: #{tpu_custom_call.1} parent=0
    _
  %s7 = ssub.s32 1, %s5
  %s8 = scalar_select 0, %s7, %s5
  $region1: #{tpu_custom_call.1} parent=0
    #allocation2 [shape = 'u8[512]{0}', space=smem, size = 0x200, scoped, tag = 'input window, operand 0, single buffered']
    #allocation3 [shape = 's32[1]{0}', space=sflag, size = 0x4, scoped, tag = 'scoped memory for tpu_custom_call.1']
    #allocation4 [shape = 's32[1]{0}', space=sflag, size = 0x4, scoped, tag = 'scoped memory for tpu_custom_call.1']
    #allocation5 [shape = 'u8[6144]{0}', space=vmem, size = 0x1800, scoped, tag = 'output window, operand 0, single buffered']
    %9 = vsyncpa [#allocation4], 0
    %10 = vsyncpa [#allocation3], 0
    // Predicated region
    $region2: #{tpu_custom_call.1} parent=1 // pred_check
      _
    $region3: #{tpu_custom_call.1} parent=1 // pred_check_branch
      %12 = sbr.rel (0) target = $region5
    $region4: #{tpu_custom_call.1} parent=1 // pred_region
      %14 = vsyncadd [#allocation4], 0
      %s16 = sshll.u32 %s0, 4
      %s17 = int_to_ptr.vmem [resolvable:$true] %s16
      %19 = dma.vmem_to_smem %s17, 16, [#allocation2], [#allocation4]
    $region5: #{tpu_custom_call.1} parent=1 // pred_fallthru
      _
    // Predicated region
    $region6: #{tpu_custom_call.1} parent=1 // pred_check
      _
    $region7: #{tpu_custom_call.1} parent=1 // pred_check_branch
      %21 = sbr.rel (0) target = $region9
    $region8: #{tpu_custom_call.1} parent=1 // pred_region
      _
    $region9: #{tpu_custom_call.1} parent=1 // pred_fallthru
      _
    // Predicated region
    $region10: #{tpu_custom_call.1} parent=1 // pred_check
      _
    $region11: #{tpu_custom_call.1} parent=1 // pred_check_branch
      %23 = sbr.rel (0) target = $region13
    $region12: #{tpu_custom_call.1} parent=1 // pred_region
      _
    $region13: #{tpu_custom_call.1} parent=1 // pred_fallthru
      _
    // Predicated region
    $region14: #{tpu_custom_call.1} parent=1 // pred_check
      _
    $region15: #{tpu_custom_call.1} parent=1 // pred_check_branch
      %25 = sbr.rel (0) target = $region17
    $region16: #{tpu_custom_call.1} parent=1 // pred_region
      _
    $region17: #{tpu_custom_call.1} parent=1 // pred_fallthru
      _
    // Predicated region
    $region18: #{tpu_custom_call.1} parent=1 // pred_check
      _
    $region19: #{tpu_custom_call.1} parent=1 // pred_check_branch
      %27 = sbr.rel (0) target = $region21
    $region20: #{tpu_custom_call.1} parent=1 // pred_region
      %29 = dma.done [#allocation4], 16
    $region21: #{tpu_custom_call.1} parent=1 // pred_fallthru
      _
    %30 = sfence
    %v31 = vld [vmem:[%s2] sm:$0xff]
    %s32 = sld [smem:[#allocation2]]
    %s33 = smul.f32 %s32, %s32
    %s34 = sld [smem:[#allocation2 + $0x1]]
    %s35 = sld [smem:[#allocation2 + $0x2]]
    %s36 = sld [smem:[#allocation2 + $0x3]]
    %s37 = sld [smem:[#allocation2 + $0x4]]
    %s38 = sld [smem:[#allocation2 + $0x5]]
    %s39 = sld [smem:[#allocation2 + $0x6]]
    %v40 = vld [vmem:[%s1] sm:$0xff]
    %v41 = vld [vmem:[%s1 + $0x8] sm:$0xff]
    %v42 = vld [vmem:[%s1 + $0x10] sm:$0xff]
    %v43 = vld [vmem:[%s1 + $0x18] sm:$0xff]
    %v44 = vld [vmem:[%s1 + $0x20] sm:$0xff]
    %v45 = vld [vmem:[%s1 + $0x28] sm:$0xff]
    %v46 = vld [vmem:[%s1 + $0x30] sm:$0xff]
    %v47 = vld [vmem:[%s1 + $0x38] sm:$0xff]
    %v48 = vld [vmem:[%s1 + $0x40] sm:$0xff]
    %v49 = vld [vmem:[%s1 + $0x48] sm:$0xff]
    %v50 = vld [vmem:[%s1 + $0x50] sm:$0xff]
    %v51 = vld [vmem:[%s1 + $0x58] sm:$0xff]
    %v52 = vld [vmem:[%s1 + $0x60] sm:$0xff]
    %v53 = vld [vmem:[%s1 + $0x68] sm:$0xff]
    %v54 = vld [vmem:[%s1 + $0x70] sm:$0xff]
    %v55 = vld [vmem:[%s1 + $0x78] sm:$0xff]
    %vm56 = vcmask 261120
    %v58 = vsel %vm56, %v31, 0
    %v61 = vsel %vm56, %v40, 0
    %v64 = vsel %vm56, %v41, 0
    %v67 = vsel %vm56, %v42, 0
    %v70 = vsel %vm56, %v43, 0
    %v73 = vsel %vm56, %v44, 0
    %v76 = vsel %vm56, %v45, 0
    %v79 = vsel %vm56, %v46, 0
    %v82 = vsel %vm56, %v47, 0
    %v85 = vsel %vm56, %v48, 0
    %v88 = vsel %vm56, %v49, 0
    %v91 = vsel %vm56, %v50, 0
    %v94 = vsel %vm56, %v51, 0
    %v97 = vsel %vm56, %v52, 0
    %v100 = vsel %vm56, %v53, 0
    %v103 = vsel %vm56, %v54, 0
    %v106 = vsel %vm56, %v55, 0
    %108 = vmatpush.xpose.msra.mxu0 %v106
    %109 = vmatpush.xpose.msra.mxu0 %v103
    %110 = vmatpush.xpose.msra.mxu0 %v100
    %111 = vmatpush.xpose.msra.mxu0 %v97
    %112 = vmatpush.xpose.msra.mxu0 %v94
    %113 = vmatpush.xpose.msra.mxu0 %v91
    %114 = vmatpush.xpose.msra.mxu0 %v88
    %115 = vmatpush.xpose.msra.mxu0 %v85
    %116 = vmatpush.xpose.msra.mxu0 %v82
    %117 = vmatpush.xpose.msra.mxu0 %v79
    %118 = vmatpush.xpose.msra.mxu0 %v76
    %119 = vmatpush.xpose.msra.mxu0 %v73
    %120 = vmatpush.xpose.msra.mxu0 %v70
    %121 = vmatpush.xpose.msra.mxu0 %v67
    %122 = vmatpush.xpose.msra.mxu0 %v64
    %123 = vmatpush.xpose.msra.mxu0 %v61
    %124 = vmatmul.f32.gmra.mxu0 %v58
    %v125 = vpop.f32.mrf.mxu0
    %v126 = vadd.f32 0.0, %v125
    %127 = vdwg.mxu0
    %v128 = vstv %s34
    %v129 = vadd.f32 %v126, %v128
    %v130 = vstv %s35
    %v131 = vadd.f32 %v126, %v130
    %v132 = vstv %s36
    %v133 = vadd.f32 %v126, %v132
    %v134 = vstv %s37
    %v135 = vadd.f32 %v126, %v134
    %v136 = vstv %s38
    %v137 = vadd.f32 %v126, %v136
    %v138 = vstv %s39
    %v139 = vadd.f32 %v126, %v138
    %v140 = vstv %s32
    %v141 = vmul.f32 %v129, %v129
    %v142 = vstv %s33
    %v143 = vadd.f32 %v142, %v141
    %v144 = vmul.f32 %v131, %v131
    %v146 = vrot.slane %v144, 1
    %v148 = vadd.f32 %v143, %v146
    %v149 = vmul.f32 %v133, %v133
    %v151 = vrot.slane %v149, 2
    %v153 = vadd.f32 %v148, %v151
    %v154 = vrcp.pop %v153
    %v155 = vmul.f32 %v153, %v154
    %v156 = vsub.f32 1.0, %v155
    %v157 = vmul.f32 %v154, %v156
    %v158 = vadd.f32 %v154, %v157
    %vm159 = vweird.f32 %v153
    %vm160 = vweird.f32 %v154
    %vm161 = vmor %vm159, %vm160
    %v162 = vsel %vm161, %v154, %v158
    %v163 = vand.u32 2147483647, %v153
    %vm164 = vcmp.eq.f32.partialorder %v163, 8.507059e+37
    %v165 = vand.u32 %v153, 2147483648
    %v166 = vor.u32 1.1754944e-38, %v165
    %v167 = vsel %vm164, %v166, %v162
    %v168 = vmul.f32 %v167, 2.0
    %v169 = vrot.slane %v149, 1
    %v171 = vadd.f32 %v144, %v169
    %v173 = vrot.slane %v171, 1
    %v175 = vmul.f32 %v168, %v173
    %v176 = vsub.f32 1.0, %v175
    %v178 = vrot.slane %v131, 1
    %v180 = vmul.f32 %v129, %v178
    %v181 = vmul.f32 %v133, %v140
    %v183 = vrot.slane %v181, 2
    %v185 = vsub.f32 %v180, %v183
    %v186 = vmul.f32 %v168, %v185
    %v188 = vrot.slane %v133, 2
    %v190 = vmul.f32 %v129, %v188
    %v191 = vmul.f32 %v131, %v140
    %v193 = vrot.slane %v191, 1
    %v195 = vadd.f32 %v190, %v193
    %v196 = vmul.f32 %v168, %v195
    %v197 = vadd.f32 %v180, %v183
    %v198 = vmul.f32 %v168, %v197
    %v199 = vadd.f32 %v141, %v151
    %v200 = vmul.f32 %v168, %v199
    %v201 = vsub.f32 1.0, %v200
    %v202 = vrot.slane %v133, 1
    %v204 = vmul.f32 %v131, %v202
    %v205 = vmul.f32 %v129, %v140
    %v207 = vrot.slane %v205, 7
    %v209 = vsub.f32 %v204, %v207
    %v211 = vrot.slane %v209, 1
    %v213 = vmul.f32 %v168, %v211
    %v214 = vsub.f32 %v190, %v193
    %v215 = vmul.f32 %v168, %v214
    %v216 = vadd.f32 %v204, %v207
    %v218 = vrot.slane %v216, 1
    %v220 = vmul.f32 %v168, %v218
    %v221 = vadd.f32 %v141, %v146
    %v222 = vmul.f32 %v168, %v221
    %v223 = vsub.f32 1.0, %v222
    %v224 = vld [vmem:[%s3] sm:$0x1]
    %v225 = vld [vmem:[%s3 + $0x1] sm:$0x1]
    %v226 = vld [vmem:[%s3 + $0x2] sm:$0x1]
    %v227 = vld [vmem:[%s3 + $0x3] sm:$0x1]
    %v228 = vld [vmem:[%s3 + $0x4] sm:$0x1]
    %v229 = vld [vmem:[%s3 + $0x5] sm:$0x1]
    %v230 = vld [vmem:[%s3 + $0x6] sm:$0x1]
    %v231 = vld [vmem:[%s3 + $0x7] sm:$0x1]
    %v232 = vld [vmem:[%s3 + $0x8] sm:$0x1]
    %v233 = vld [vmem:[%s3 + $0x9] sm:$0x1]
    %v234 = vld [vmem:[%s3 + $0xa] sm:$0x1]
    %v235 = vld [vmem:[%s3 + $0xb] sm:$0x1]
    %v236 = vmul.f32 %v224, %v176
    %v237 = vmul.f32 %v225, %v198
    %v238 = vadd.f32 %v236, %v237
    %v239 = vmul.f32 %v226, %v215
    %v240 = vadd.f32 %v238, %v239
    %241 = vst [vmem:[#allocation5] sm:$0x1] %v240
    %v242 = vmul.f32 %v224, %v186
    %v243 = vmul.f32 %v225, %v201
    %v244 = vadd.f32 %v242, %v243
    %v245 = vmul.f32 %v226, %v220
    %v246 = vadd.f32 %v244, %v245
    %s247 = scalar_lea.vmem [#allocation5], 1
    %248 = vst [vmem:[%s247] sm:$0x1] %v246
    %v249 = vmul.f32 %v224, %v196
    %v250 = vmul.f32 %v225, %v213
    %v251 = vadd.f32 %v249, %v250
    %v252 = vmul.f32 %v226, %v223
    %v253 = vadd.f32 %v251, %v252
    %s254 = scalar_lea.vmem [#allocation5], 2
    %255 = vst [vmem:[%s254] sm:$0x1] %v253
    %257 = vst [vmem:[#allocation1] sm:$0xff] %v135
    %s258 = scalar_lea.vmem [#allocation1], 3
    %v259 = vld [vmem:[%s258] ss:$9 sm:$0xff]
    %v261 = vmul.f32 %v224, %v259
    %263 = vst [vmem:[#allocation1] sm:$0xff] %v137
    %s264 = scalar_lea.vmem [#allocation1], 4
    %v265 = vld [vmem:[%s264] ss:$9 sm:$0xff]
    %v267 = vmul.f32 %v225, %v265
    %v268 = vadd.f32 %v261, %v267
    %270 = vst [vmem:[#allocation1] sm:$0xff] %v139
    %s271 = scalar_lea.vmem [#allocation1], 5
    %v272 = vld [vmem:[%s271] ss:$9 sm:$0xff]
    %v274 = vmul.f32 %v226, %v272
    %v275 = vadd.f32 %v268, %v274
    %v276 = vadd.f32 %v275, %v227
    %s277 = scalar_lea.vmem [#allocation5], 3
    %278 = vst [vmem:[%s277] sm:$0x1] %v276
    %v279 = vmul.f32 %v228, %v176
    %v280 = vmul.f32 %v229, %v198
    %v281 = vadd.f32 %v279, %v280
    %v282 = vmul.f32 %v230, %v215
    %v283 = vadd.f32 %v281, %v282
    %s284 = scalar_lea.vmem [#allocation5], 4
    %285 = vst [vmem:[%s284] sm:$0x1] %v283
    %v286 = vmul.f32 %v228, %v186
    %v287 = vmul.f32 %v229, %v201
    %v288 = vadd.f32 %v286, %v287
    %v289 = vmul.f32 %v230, %v220
    %v290 = vadd.f32 %v288, %v289
    %s291 = scalar_lea.vmem [#allocation5], 5
    %292 = vst [vmem:[%s291] sm:$0x1] %v290
    %v293 = vmul.f32 %v228, %v196
    %v294 = vmul.f32 %v229, %v213
    %v295 = vadd.f32 %v293, %v294
    %v296 = vmul.f32 %v230, %v223
    %v297 = vadd.f32 %v295, %v296
    %s298 = scalar_lea.vmem [#allocation5], 6
    %299 = vst [vmem:[%s298] sm:$0x1] %v297
    %300 = vst [vmem:[#allocation1] sm:$0xff] %v135
    %s301 = scalar_lea.vmem [#allocation1], 3
    %v302 = vld [vmem:[%s301] ss:$9 sm:$0xff]
    %v304 = vmul.f32 %v228, %v302
    %305 = vst [vmem:[#allocation1] sm:$0xff] %v137
    %s306 = scalar_lea.vmem [#allocation1], 4
    %v307 = vld [vmem:[%s306] ss:$9 sm:$0xff]
    %v309 = vmul.f32 %v229, %v307
    %v310 = vadd.f32 %v304, %v309
    %311 = vst [vmem:[#allocation1] sm:$0xff] %v139
    %s312 = scalar_lea.vmem [#allocation1], 5
    %v313 = vld [vmem:[%s312] ss:$9 sm:$0xff]
    %v315 = vmul.f32 %v230, %v313
    %v316 = vadd.f32 %v310, %v315
    %v317 = vadd.f32 %v316, %v231
    %s318 = scalar_lea.vmem [#allocation5], 7
    %319 = vst [vmem:[%s318] sm:$0x1] %v317
    %v320 = vmul.f32 %v232, %v176
    %v321 = vmul.f32 %v233, %v198
    %v322 = vadd.f32 %v320, %v321
    %v323 = vmul.f32 %v234, %v215
    %v324 = vadd.f32 %v322, %v323
    %s325 = scalar_lea.vmem [#allocation5], 8
    %326 = vst [vmem:[%s325] sm:$0x1] %v324
    %v327 = vmul.f32 %v232, %v186
    %v328 = vmul.f32 %v233, %v201
    %v329 = vadd.f32 %v327, %v328
    %v330 = vmul.f32 %v234, %v220
    %v331 = vadd.f32 %v329, %v330
    %s332 = scalar_lea.vmem [#allocation5], 9
    %333 = vst [vmem:[%s332] sm:$0x1] %v331
    %v334 = vmul.f32 %v232, %v196
    %v335 = vmul.f32 %v233, %v213
    %v336 = vadd.f32 %v334, %v335
    %v337 = vmul.f32 %v234, %v223
    %v338 = vadd.f32 %v336, %v337
    %s339 = scalar_lea.vmem [#allocation5], 10
    %340 = vst [vmem:[%s339] sm:$0x1] %v338
    %341 = vst [vmem:[#allocation1] sm:$0xff] %v135
    %s342 = scalar_lea.vmem [#allocation1], 3
    %v343 = vld [vmem:[%s342] ss:$9 sm:$0xff]
    %v345 = vmul.f32 %v232, %v343
    %346 = vst [vmem:[#allocation1] sm:$0xff] %v137
    %s347 = scalar_lea.vmem [#allocation1], 4
    %v348 = vld [vmem:[%s347] ss:$9 sm:$0xff]
    %v350 = vmul.f32 %v233, %v348
    %v351 = vadd.f32 %v345, %v350
    %352 = vst [vmem:[#allocation1] sm:$0xff] %v139
    %s353 = scalar_lea.vmem [#allocation1], 5
    %v354 = vld [vmem:[%s353] ss:$9 sm:$0xff]
    %v356 = vmul.f32 %v234, %v354
    %v357 = vadd.f32 %v351, %v356
    %v358 = vadd.f32 %v357, %v235
    %s359 = scalar_lea.vmem [#allocation5], 11
    %360 = vst [vmem:[%s359] sm:$0x1] %v358
    // Predicated region
    $region22: #{tpu_custom_call.1} parent=1 // pred_check
      _
    $region23: #{tpu_custom_call.1} parent=1 // pred_check_branch
      %362 = sbr.rel (0) target = $region25
    $region24: #{tpu_custom_call.1} parent=1 // pred_region
      %364 = vsyncadd [#allocation3], 0
      %s365 = sshll.u32 [#allocation5], 4
      %s366 = int_to_ptr.vmem [resolvable:$true] %s365
      %s367 = sshll.u32 %s4, 4
      %s368 = int_to_ptr.hbm [resolvable:$true] %s367
      %373 = dma.vmem_to_hbm [thread:$0]  %s366, 192, %s368, [#allocation3], 16, 16, 1
    $region25: #{tpu_custom_call.1} parent=1 // pred_fallthru
      _
    // Predicated region
    $region26: #{tpu_custom_call.1} parent=1 // pred_check
      _
    $region27: #{tpu_custom_call.1} parent=1 // pred_check_branch
      %375 = sbr.rel (0) target = $region29
    $region28: #{tpu_custom_call.1} parent=1 // pred_region
      %377 = dma.done [#allocation3], 192
    $region29: #{tpu_custom_call.1} parent=1 // pred_fallthru
      _
    %378 = vsyncpa [#allocation3], 1
    %379 = vsyncpa [#allocation4], 1

</llo_original>
